<compile_context>
chip_gen: v6e
topology: v6e:2x2x1
jax: 0.10.0
libtpu: 0.0.40
codegen_flags: <defaults>
</compile_context>

<pallas_src>
import functools

import jax
import jax.numpy as jnp
from jax.experimental import pallas as pl
from jax.experimental.pallas import tpu as pltpu


def _depthwise3x3_flat(xf, dw_ref, *, H, W):
    """Depthwise 3x3 (pad=1) on a channels-first flat tile.

    xf:      (C, H*W) float32, spatial flattened on the lane axis.
    dw_ref:  (9, C, 1) ref of per-channel taps, tap k = (kh, kw) = (k//3, k%3).
    Returns (C, H*W) float32.
    """
    C, L = xf.shape
    idx = jax.lax.broadcasted_iota(jnp.int32, (C, L), 1)
    col = idx % W  # column within the row (power-of-two W -> bitwise and)

    # Center tap (dy=0, dx=0): no shift, no mask.
    acc = xf * dw_ref[4]

    for k in range(9):
        if k == 4:
            continue
        dy = k // 3 - 1
        dx = k % 3 - 1
        s = dy * W + dx  # flat source offset: out[i] += tap * x[i + s]
        shifted = pltpu.roll(xf, shift=(-s) % L, axis=1)

        conds = []
        if dx == -1:
            conds.append(col >= 1)
        elif dx == 1:
            conds.append(col < W - 1)
        if dy == -1:
            conds.append(idx >= W)
        elif dy == 1:
            conds.append(idx < (H - 1) * W)
        mask = conds[0]
        for c in conds[1:]:
            mask = jnp.logical_and(mask, c)

        acc = acc + jnp.where(mask, shifted, 0.0) * dw_ref[k]
    return acc


def _double_ds_conv_kernel(x_ref, dw1_ref, w1_ref, b1_ref,
                           dw2_ref, w2_ref, b2_ref, o_ref,
                           *, H, W, C_in, C_out):
    f32 = jnp.float32
    bf16 = jnp.bfloat16

    # ---------- stage 1: depthwise 3x3 (bias folded into b1) ----------------
    x = x_ref[0].astype(f32)                            # (C_in, H*W)
    y1 = _depthwise3x3_flat(x, dw1_ref, H=H, W=W)       # (C_in, H*W) f32

    # ---------- pointwise 1x1 + BN + ReLU (folded into w1 / b1), bf16 MXU ----
    a1 = jnp.dot(w1_ref[...], y1.astype(bf16),          # (C_out, H*W) f32 acc
                 preferred_element_type=f32)
    a1 = jnp.maximum(a1 + b1_ref[...], 0.0)

    # ---------- stage 2: depthwise 3x3, boundary handled by masks (no pad) ---
    y2 = _depthwise3x3_flat(a1, dw2_ref, H=H, W=W)      # (C_out, H*W) f32

    # ---------- pointwise 1x1 + BN + ReLU (folded into w2 / b2), bf16 MXU ----
    out = jnp.dot(w2_ref[...], y2.astype(bf16),
                  preferred_element_type=f32)
    out = jnp.maximum(out + b2_ref[...], 0.0)           # (C_out, H*W)

    # Already channels-first / lane-dense: no transpose needed.
    o_ref[0] = out.astype(o_ref.dtype)


def _fold_stage(dw_w, dw_b, pw_w, pw_b, gamma, beta, mean, var, eps):
    """Fold depthwise bias + pointwise conv + BatchNorm into (taps, W_eff, b_eff).

    Returns:
      taps  (9, C, 1)     f32   per-input-channel depthwise taps
      w_eff (Cout, Cin)   bf16  folded pointwise*BN scale (channels-first)
      b_eff (Cout, 1)     f32   folded depthwise-bias + pointwise-bias + BN shift
    """
    c = dw_w.shape[0]
    P = pw_w[:, :, 0, 0]                                # (Cout, Cin)
    s = gamma / jnp.sqrt(var + eps)                     # (Cout,)
    t = beta - mean * s
    w_eff = (P * s[:, None]).astype(jnp.bfloat16)       # (Cout, Cin)
    b_eff = (s * (P @ dw_b + pw_b) + t).reshape(-1, 1)  # (Cout, 1)
    taps = dw_w[:, 0].reshape(c, 9).T.reshape(9, c, 1).astype(jnp.float32)
    return taps, w_eff, b_eff


def double_ds_conv(x, params, eps=1e-5):
    """Pallas TPU implementation of the PyTorch DoubleDSConv forward (eval BN)."""
    N, C_in, H, W = x.shape
    C_out = params["pw1_w"].shape[0]
    L = H * W

    dw1, w1, b1 = _fold_stage(params["dw1_w"], params["dw1_b"],
                              params["pw1_w"], params["pw1_b"],
                              params["bn1_gamma"], params["bn1_beta"],
                              params["bn1_mean"], params["bn1_var"], eps)
    dw2, w2, b2 = _fold_stage(params["dw2_w"], params["dw2_b"],
                              params["pw2_w"], params["pw2_b"],
                              params["bn2_gamma"], params["bn2_beta"],
                              params["bn2_mean"], params["bn2_var"], eps)

    # NCHW -> (N, C, H*W): free row-major reshape, lane-dense kernel blocks.
    x_flat = x.reshape(N, C_in, L)

    kernel = functools.partial(_double_ds_conv_kernel,
                               H=H, W=W, C_in=C_in, C_out=C_out)

    out_flat = pl.pallas_call(
        kernel,
        out_shape=jax.ShapeDtypeStruct((N, C_out, L), x.dtype),
        grid=(N,),
        in_specs=[
            pl.BlockSpec((1, C_in, L), lambda n: (n, 0, 0)),    # x (flat)
            pl.BlockSpec((9, C_in, 1), lambda n: (0, 0, 0)),    # dw1 taps
            pl.BlockSpec((C_out, C_in), lambda n: (0, 0)),      # w1 (folded, bf16)
            pl.BlockSpec((C_out, 1), lambda n: (0, 0)),         # b1 (folded)
            pl.BlockSpec((9, C_out, 1), lambda n: (0, 0, 0)),   # dw2 taps
            pl.BlockSpec((C_out, C_out), lambda n: (0, 0)),     # w2 (folded, bf16)
            pl.BlockSpec((C_out, 1), lambda n: (0, 0)),         # b2 (folded)
        ],
        out_specs=pl.BlockSpec((1, C_out, L), lambda n: (n, 0, 0)),
        compiler_params=pltpu.CompilerParams(
            dimension_semantics=("parallel",)),
    )(x_flat, dw1, w1, b1, dw2, w2, b2)

    return out_flat.reshape(N, C_out, H, W)


def double_ds_conv_ref(x, p, eps=1e-5):
    """Pure-JAX reference mirroring the PyTorch module (eval-mode BatchNorm)."""
    def ds_block(h, dw_w, dw_b, pw_w, pw_b, g, b, m, v):
        c = h.shape[1]
        d = jax.lax.conv_general_dilated(
            h, dw_w, window_strides=(1, 1), padding=((1, 1), (1, 1)),
            feature_group_count=c,
            dimension_numbers=("NCHW", "OIHW", "NCHW"),
            precision=jax.lax.Precision.HIGHEST)
        d = d + dw_b[None, :, None, None]
        z = jnp.einsum("oc,nchw->nohw", pw_w[:, :, 0, 0], d,
                       precision=jax.lax.Precision.HIGHEST)
        z = z + pw_b[None, :, None, None]
        z = (z - m[None, :, None, None]) / jnp.sqrt(v[None, :, None, None] + eps)
        z = z * g[None, :, None, None] + b[None, :, None, None]
        return jnp.maximum(z, 0.0)

    h = ds_block(x, p["dw1_w"], p["dw1_b"], p["pw1_w"], p["pw1_b"],
                 p["bn1_gamma"], p["bn1_beta"], p["bn1_mean"], p["bn1_var"])
    return ds_block(h, p["dw2_w"], p["dw2_b"], p["pw2_w"], p["pw2_b"],
                    p["bn2_gamma"], p["bn2_beta"], p["bn2_mean"], p["bn2_var"])


def init_params(key, c_in, c_out):
    ks = jax.random.split(key, 16)
    nrm = lambda k, s, sc=0.3: sc * jax.random.normal(k, s, jnp.float32)
    return {
        "dw1_w": nrm(ks[0], (c_in, 1, 3, 3)),
        "dw1_b": nrm(ks[1], (c_in,), 0.1),
        "pw1_w": nrm(ks[2], (c_out, c_in, 1, 1)),
        "pw1_b": nrm(ks[3], (c_out,), 0.1),
        "bn1_gamma": 1.0 + nrm(ks[4], (c_out,), 0.1),
        "bn1_beta": nrm(ks[5], (c_out,), 0.1),
        "bn1_mean": nrm(ks[6], (c_out,), 0.1),
        "bn1_var": jax.random.uniform(ks[7], (c_out,), jnp.float32, 0.5, 1.5),
        "dw2_w": nrm(ks[8], (c_out, 1, 3, 3)),
        "dw2_b": nrm(ks[9], (c_out,), 0.1),
        "pw2_w": nrm(ks[10], (c_out, c_out, 1, 1)),
        "pw2_b": nrm(ks[11], (c_out,), 0.1),
        "bn2_gamma": 1.0 + nrm(ks[12], (c_out,), 0.1),
        "bn2_beta": nrm(ks[13], (c_out,), 0.1),
        "bn2_mean": nrm(ks[14], (c_out,), 0.1),
        "bn2_var": jax.random.uniform(ks[15], (c_out,), jnp.float32, 0.5, 1.5),
    }


if __name__ == "__main__":
    key = jax.random.PRNGKey(0)
    N, C_in, C_out, H, W = 2, 4, 8, 16, 16
    kx, kp = jax.random.split(key)
    x = jax.random.normal(kx, (N, C_in, H, W), jnp.float32)
    params = init_params(kp, C_in, C_out)

    out = double_ds_conv(x, params)
    out = jax.block_until_ready(out)

    expected = double_ds_conv_ref(x, params)
    assert out.shape == (N, C_out, H, W), out.shape
    assert out.dtype == x.dtype
    max_err = float(jnp.max(jnp.abs(out - expected)))
    # bf16 MXU operands vs. f32 HIGHEST reference -> loosened tolerance.
    assert jnp.allclose(out, expected, rtol=2e-2, atol=2e-2), max_err

    print("KERNEL_OK")
</pallas_src>

<mosaic_0001>
module attributes {stable_mosaic.version = 11 : i64} {
  func.func @_double_ds_conv_kernel(%arg0: i32, %arg1: memref<1x4x256xf32, #tpu.memory_space<vmem>>, %arg2: memref<9x4x1xf32, #tpu.memory_space<vmem>>, %arg3: memref<8x4xbf16, #tpu.memory_space<vmem>>, %arg4: memref<8x1xf32, #tpu.memory_space<vmem>>, %arg5: memref<9x8x1xf32, #tpu.memory_space<vmem>>, %arg6: memref<8x8xbf16, #tpu.memory_space<vmem>>, %arg7: memref<8x1xf32, #tpu.memory_space<vmem>>, %arg8: memref<1x8x256xf32, #tpu.memory_space<vmem>>) attributes {dimension_semantics = [#tpu.dimension_semantics<parallel>], iteration_bounds = array<i64: 2>, scalar_prefetch = 0 : i64, scratch_operands = 0 : i64, tpu.core_type = #tpu.core_type<tc>, window_params = [{transform_indices = @transform_0, window_bounds = array<i64: 1, 4, 256>}, {pipeline_mode = #tpu.pipeline_mode<synchronous>, transform_indices = @transform_1, window_bounds = array<i64: 9, 4, 1>}, {pipeline_mode = #tpu.pipeline_mode<synchronous>, transform_indices = @transform_2, window_bounds = array<i64: 8, 4>}, {pipeline_mode = #tpu.pipeline_mode<synchronous>, transform_indices = @transform_3, window_bounds = array<i64: 8, 1>}, {pipeline_mode = #tpu.pipeline_mode<synchronous>, transform_indices = @transform_4, window_bounds = array<i64: 9, 8, 1>}, {pipeline_mode = #tpu.pipeline_mode<synchronous>, transform_indices = @transform_5, window_bounds = array<i64: 8, 8>}, {pipeline_mode = #tpu.pipeline_mode<synchronous>, transform_indices = @transform_6, window_bounds = array<i64: 8, 1>}, {transform_indices = @transform_7, window_bounds = array<i64: 1, 8, 256>}]} {
    %c0 = arith.constant 0 : index
    %c0_0 = arith.constant 0 : index
    %c0_1 = arith.constant 0 : index
    %0 = vector.load %arg1[%c0, %c0_0, %c0_1] : memref<1x4x256xf32, #tpu.memory_space<vmem>>, vector<1x4x256xf32>
    %1 = vector.shape_cast %0 : vector<1x4x256xf32> to vector<4x256xf32>
    %2 = tpu.iota {dimensions = array<i32: 1>} : vector<4x256xi32>
    %c16_i32 = arith.constant 16 : i32
    %c0_i32 = arith.constant 0 : i32
    %3 = arith.cmpi eq, %c16_i32, %c0_i32 : i32
    %c1_i32 = arith.constant 1 : i32
    %4 = arith.select %3, %c1_i32, %c16_i32 : i32
    %5 = vector.broadcast %4 : i32 to vector<4x256xi32>
    %6 = arith.remsi %2, %5 : vector<4x256xi32>
    %c0_i32_2 = arith.constant 0 : i32
    %7 = vector.broadcast %c0_i32_2 : i32 to vector<4x256xi32>
    %8 = arith.cmpi ne, %6, %7 : vector<4x256xi32>
    %c0_i32_3 = arith.constant 0 : i32
    %9 = vector.broadcast %c0_i32_3 : i32 to vector<4x256xi32>
    %10 = arith.cmpi slt, %6, %9 : vector<4x256xi32>
    %c0_i32_4 = arith.constant 0 : i32
    %11 = arith.cmpi slt, %4, %c0_i32_4 : i32
    %12 = vector.broadcast %11 : i1 to vector<4x256xi1>
    %13 = vector.broadcast %12 : vector<4x256xi1> to vector<4x256xi1>
    %14 = arith.xori %10, %13 : vector<4x256xi1>
    %15 = arith.andi %14, %8 : vector<4x256xi1>
    %16 = vector.broadcast %4 : i32 to vector<4x256xi32>
    %17 = arith.addi %6, %16 : vector<4x256xi32>
    %18 = arith.select %15, %17, %6 : vector<4x256xi1>, vector<4x256xi32>
    %c4 = arith.constant 4 : index
    %c0_5 = arith.constant 0 : index
    %c0_6 = arith.constant 0 : index
    %19 = vector.load %arg2[%c4, %c0_5, %c0_6] : memref<9x4x1xf32, #tpu.memory_space<vmem>>, vector<1x4x1xf32>
    %20 = vector.shape_cast %19 : vector<1x4x1xf32> to vector<4x1xf32>
    %21 = vector.broadcast %20 : vector<4x1xf32> to vector<4x256xf32>
    %22 = arith.mulf %1, %21 : vector<4x256xf32>
    %c17_i32 = arith.constant 17 : i32
    %23 = tpu.dynamic_rotate %1 by %c17_i32 dim 1 : vector<4x256xf32>, i32 -> vector<4x256xf32>
    %c1_i32_7 = arith.constant 1 : i32
    %24 = vector.broadcast %c1_i32_7 : i32 to vector<4x256xi32>
    %25 = arith.cmpi sge, %18, %24 : vector<4x256xi32>
    %c16_i32_8 = arith.constant 16 : i32
    %26 = vector.broadcast %c16_i32_8 : i32 to vector<4x256xi32>
    %27 = arith.cmpi sge, %2, %26 : vector<4x256xi32>
    %28 = arith.andi %25, %27 : vector<4x256xi1>
    %cst = arith.constant 0.000000e+00 : f32
    %29 = vector.broadcast %cst : f32 to vector<4x256xf32>
    %30 = arith.select %28, %23, %29 : vector<4x256xi1>, vector<4x256xf32>
    %c0_9 = arith.constant 0 : index
    %c0_10 = arith.constant 0 : index
    %c0_11 = arith.constant 0 : index
    %31 = vector.load %arg2[%c0_9, %c0_10, %c0_11] : memref<9x4x1xf32, #tpu.memory_space<vmem>>, vector<1x4x1xf32>
    %32 = vector.shape_cast %31 : vector<1x4x1xf32> to vector<4x1xf32>
    %33 = vector.broadcast %32 : vector<4x1xf32> to vector<4x256xf32>
    %34 = arith.mulf %30, %33 : vector<4x256xf32>
    %35 = arith.addf %22, %34 : vector<4x256xf32>
    %c16_i32_12 = arith.constant 16 : i32
    %36 = tpu.dynamic_rotate %1 by %c16_i32_12 dim 1 : vector<4x256xf32>, i32 -> vector<4x256xf32>
    %c16_i32_13 = arith.constant 16 : i32
    %37 = vector.broadcast %c16_i32_13 : i32 to vector<4x256xi32>
    %38 = arith.cmpi sge, %2, %37 : vector<4x256xi32>
    %cst_14 = arith.constant 0.000000e+00 : f32
    %39 = vector.broadcast %cst_14 : f32 to vector<4x256xf32>
    %40 = arith.select %38, %36, %39 : vector<4x256xi1>, vector<4x256xf32>
    %c1 = arith.constant 1 : index
    %c0_15 = arith.constant 0 : index
    %c0_16 = arith.constant 0 : index
    %41 = vector.load %arg2[%c1, %c0_15, %c0_16] : memref<9x4x1xf32, #tpu.memory_space<vmem>>, vector<1x4x1xf32>
    %42 = vector.shape_cast %41 : vector<1x4x1xf32> to vector<4x1xf32>
    %43 = vector.broadcast %42 : vector<4x1xf32> to vector<4x256xf32>
    %44 = arith.mulf %40, %43 : vector<4x256xf32>
    %45 = arith.addf %35, %44 : vector<4x256xf32>
    %c15_i32 = arith.constant 15 : i32
    %46 = tpu.dynamic_rotate %1 by %c15_i32 dim 1 : vector<4x256xf32>, i32 -> vector<4x256xf32>
    %c15_i32_17 = arith.constant 15 : i32
    %47 = vector.broadcast %c15_i32_17 : i32 to vector<4x256xi32>
    %48 = arith.cmpi slt, %18, %47 : vector<4x256xi32>
    %c16_i32_18 = arith.constant 16 : i32
    %49 = vector.broadcast %c16_i32_18 : i32 to vector<4x256xi32>
    %50 = arith.cmpi sge, %2, %49 : vector<4x256xi32>
    %51 = arith.andi %48, %50 : vector<4x256xi1>
    %cst_19 = arith.constant 0.000000e+00 : f32
    %52 = vector.broadcast %cst_19 : f32 to vector<4x256xf32>
    %53 = arith.select %51, %46, %52 : vector<4x256xi1>, vector<4x256xf32>
    %c2 = arith.constant 2 : index
    %c0_20 = arith.constant 0 : index
    %c0_21 = arith.constant 0 : index
    %54 = vector.load %arg2[%c2, %c0_20, %c0_21] : memref<9x4x1xf32, #tpu.memory_space<vmem>>, vector<1x4x1xf32>
    %55 = vector.shape_cast %54 : vector<1x4x1xf32> to vector<4x1xf32>
    %56 = vector.broadcast %55 : vector<4x1xf32> to vector<4x256xf32>
    %57 = arith.mulf %53, %56 : vector<4x256xf32>
    %58 = arith.addf %45, %57 : vector<4x256xf32>
    %c1_i32_22 = arith.constant 1 : i32
    %59 = tpu.dynamic_rotate %1 by %c1_i32_22 dim 1 : vector<4x256xf32>, i32 -> vector<4x256xf32>
    %c1_i32_23 = arith.constant 1 : i32
    %60 = vector.broadcast %c1_i32_23 : i32 to vector<4x256xi32>
    %61 = arith.cmpi sge, %18, %60 : vector<4x256xi32>
    %cst_24 = arith.constant 0.000000e+00 : f32
    %62 = vector.broadcast %cst_24 : f32 to vector<4x256xf32>
    %63 = arith.select %61, %59, %62 : vector<4x256xi1>, vector<4x256xf32>
    %c3 = arith.constant 3 : index
    %c0_25 = arith.constant 0 : index
    %c0_26 = arith.constant 0 : index
    %64 = vector.load %arg2[%c3, %c0_25, %c0_26] : memref<9x4x1xf32, #tpu.memory_space<vmem>>, vector<1x4x1xf32>
    %65 = vector.shape_cast %64 : vector<1x4x1xf32> to vector<4x1xf32>
    %66 = vector.broadcast %65 : vector<4x1xf32> to vector<4x256xf32>
    %67 = arith.mulf %63, %66 : vector<4x256xf32>
    %68 = arith.addf %58, %67 : vector<4x256xf32>
    %c255_i32 = arith.constant 255 : i32
    %69 = tpu.dynamic_rotate %1 by %c255_i32 dim 1 : vector<4x256xf32>, i32 -> vector<4x256xf32>
    %c15_i32_27 = arith.constant 15 : i32
    %70 = vector.broadcast %c15_i32_27 : i32 to vector<4x256xi32>
    %71 = arith.cmpi slt, %18, %70 : vector<4x256xi32>
    %cst_28 = arith.constant 0.000000e+00 : f32
    %72 = vector.broadcast %cst_28 : f32 to vector<4x256xf32>
    %73 = arith.select %71, %69, %72 : vector<4x256xi1>, vector<4x256xf32>
    %c5 = arith.constant 5 : index
    %c0_29 = arith.constant 0 : index
    %c0_30 = arith.constant 0 : index
    %74 = vector.load %arg2[%c5, %c0_29, %c0_30] : memref<9x4x1xf32, #tpu.memory_space<vmem>>, vector<1x4x1xf32>
    %75 = vector.shape_cast %74 : vector<1x4x1xf32> to vector<4x1xf32>
    %76 = vector.broadcast %75 : vector<4x1xf32> to vector<4x256xf32>
    %77 = arith.mulf %73, %76 : vector<4x256xf32>
    %78 = arith.addf %68, %77 : vector<4x256xf32>
    %c241_i32 = arith.constant 241 : i32
    %79 = tpu.dynamic_rotate %1 by %c241_i32 dim 1 : vector<4x256xf32>, i32 -> vector<4x256xf32>
    %c1_i32_31 = arith.constant 1 : i32
    %80 = vector.broadcast %c1_i32_31 : i32 to vector<4x256xi32>
    %81 = arith.cmpi sge, %18, %80 : vector<4x256xi32>
    %c240_i32 = arith.constant 240 : i32
    %82 = vector.broadcast %c240_i32 : i32 to vector<4x256xi32>
    %83 = arith.cmpi slt, %2, %82 : vector<4x256xi32>
    %84 = arith.andi %81, %83 : vector<4x256xi1>
    %cst_32 = arith.constant 0.000000e+00 : f32
    %85 = vector.broadcast %cst_32 : f32 to vector<4x256xf32>
    %86 = arith.select %84, %79, %85 : vector<4x256xi1>, vector<4x256xf32>
    %c6 = arith.constant 6 : index
    %c0_33 = arith.constant 0 : index
    %c0_34 = arith.constant 0 : index
    %87 = vector.load %arg2[%c6, %c0_33, %c0_34] : memref<9x4x1xf32, #tpu.memory_space<vmem>>, vector<1x4x1xf32>
    %88 = vector.shape_cast %87 : vector<1x4x1xf32> to vector<4x1xf32>
    %89 = vector.broadcast %88 : vector<4x1xf32> to vector<4x256xf32>
    %90 = arith.mulf %86, %89 : vector<4x256xf32>
    %91 = arith.addf %78, %90 : vector<4x256xf32>
    %c240_i32_35 = arith.constant 240 : i32
    %92 = tpu.dynamic_rotate %1 by %c240_i32_35 dim 1 : vector<4x256xf32>, i32 -> vector<4x256xf32>
    %c240_i32_36 = arith.constant 240 : i32
    %93 = vector.broadcast %c240_i32_36 : i32 to vector<4x256xi32>
    %94 = arith.cmpi slt, %2, %93 : vector<4x256xi32>
    %cst_37 = arith.constant 0.000000e+00 : f32
    %95 = vector.broadcast %cst_37 : f32 to vector<4x256xf32>
    %96 = arith.select %94, %92, %95 : vector<4x256xi1>, vector<4x256xf32>
    %c7 = arith.constant 7 : index
    %c0_38 = arith.constant 0 : index
    %c0_39 = arith.constant 0 : index
    %97 = vector.load %arg2[%c7, %c0_38, %c0_39] : memref<9x4x1xf32, #tpu.memory_space<vmem>>, vector<1x4x1xf32>
    %98 = vector.shape_cast %97 : vector<1x4x1xf32> to vector<4x1xf32>
    %99 = vector.broadcast %98 : vector<4x1xf32> to vector<4x256xf32>
    %100 = arith.mulf %96, %99 : vector<4x256xf32>
    %101 = arith.addf %91, %100 : vector<4x256xf32>
    %c239_i32 = arith.constant 239 : i32
    %102 = tpu.dynamic_rotate %1 by %c239_i32 dim 1 : vector<4x256xf32>, i32 -> vector<4x256xf32>
    %c15_i32_40 = arith.constant 15 : i32
    %103 = vector.broadcast %c15_i32_40 : i32 to vector<4x256xi32>
    %104 = arith.cmpi slt, %18, %103 : vector<4x256xi32>
    %c240_i32_41 = arith.constant 240 : i32
    %105 = vector.broadcast %c240_i32_41 : i32 to vector<4x256xi32>
    %106 = arith.cmpi slt, %2, %105 : vector<4x256xi32>
    %107 = arith.andi %104, %106 : vector<4x256xi1>
    %cst_42 = arith.constant 0.000000e+00 : f32
    %108 = vector.broadcast %cst_42 : f32 to vector<4x256xf32>
    %109 = arith.select %107, %102, %108 : vector<4x256xi1>, vector<4x256xf32>
    %c8 = arith.constant 8 : index
    %c0_43 = arith.constant 0 : index
    %c0_44 = arith.constant 0 : index
    %110 = vector.load %arg2[%c8, %c0_43, %c0_44] : memref<9x4x1xf32, #tpu.memory_space<vmem>>, vector<1x4x1xf32>
    %111 = vector.shape_cast %110 : vector<1x4x1xf32> to vector<4x1xf32>
    %112 = vector.broadcast %111 : vector<4x1xf32> to vector<4x256xf32>
    %113 = arith.mulf %109, %112 : vector<4x256xf32>
    %114 = arith.addf %101, %113 : vector<4x256xf32>
    %c0_45 = arith.constant 0 : index
    %c0_46 = arith.constant 0 : index
    %115 = vector.load %arg3[%c0_45, %c0_46] : memref<8x4xbf16, #tpu.memory_space<vmem>>, vector<8x4xbf16>
    %116 = arith.truncf %114 : vector<4x256xf32> to vector<4x256xbf16>
    %cst_47 = arith.constant dense<0.000000e+00> : vector<8x256xf32>
    %117 = tpu.matmul %115, %116, %cst_47 {dimension_numbers = #tpu.dot_dimension_numbers<[1], [0], [0], [1], [0, 0, 1, 1], [], []>} : vector<8x4xbf16>, vector<4x256xbf16>, vector<8x256xf32> -> vector<8x256xf32>
    %c0_48 = arith.constant 0 : index
    %c0_49 = arith.constant 0 : index
    %118 = vector.load %arg4[%c0_48, %c0_49] : memref<8x1xf32, #tpu.memory_space<vmem>>, vector<8x1xf32>
    %119 = vector.broadcast %118 : vector<8x1xf32> to vector<8x256xf32>
    %120 = arith.addf %117, %119 : vector<8x256xf32>
    %cst_50 = arith.constant 0.000000e+00 : f32
    %121 = vector.broadcast %cst_50 : f32 to vector<8x256xf32>
    %122 = arith.maximumf %120, %121 : vector<8x256xf32>
    %123 = tpu.iota {dimensions = array<i32: 1>} : vector<8x256xi32>
    %c16_i32_51 = arith.constant 16 : i32
    %c0_i32_52 = arith.constant 0 : i32
    %124 = arith.cmpi eq, %c16_i32_51, %c0_i32_52 : i32
    %c1_i32_53 = arith.constant 1 : i32
    %125 = arith.select %124, %c1_i32_53, %c16_i32_51 : i32
    %126 = vector.broadcast %125 : i32 to vector<8x256xi32>
    %127 = arith.remsi %123, %126 : vector<8x256xi32>
    %c0_i32_54 = arith.constant 0 : i32
    %128 = vector.broadcast %c0_i32_54 : i32 to vector<8x256xi32>
    %129 = arith.cmpi ne, %127, %128 : vector<8x256xi32>
    %c0_i32_55 = arith.constant 0 : i32
    %130 = vector.broadcast %c0_i32_55 : i32 to vector<8x256xi32>
    %131 = arith.cmpi slt, %127, %130 : vector<8x256xi32>
    %c0_i32_56 = arith.constant 0 : i32
    %132 = arith.cmpi slt, %125, %c0_i32_56 : i32
    %133 = vector.broadcast %132 : i1 to vector<8x256xi1>
    %134 = vector.broadcast %133 : vector<8x256xi1> to vector<8x256xi1>
    %135 = arith.xori %131, %134 : vector<8x256xi1>
    %136 = arith.andi %135, %129 : vector<8x256xi1>
    %137 = vector.broadcast %125 : i32 to vector<8x256xi32>
    %138 = arith.addi %127, %137 : vector<8x256xi32>
    %139 = arith.select %136, %138, %127 : vector<8x256xi1>, vector<8x256xi32>
    %c4_57 = arith.constant 4 : index
    %c0_58 = arith.constant 0 : index
    %c0_59 = arith.constant 0 : index
    %140 = vector.load %arg5[%c4_57, %c0_58, %c0_59] : memref<9x8x1xf32, #tpu.memory_space<vmem>>, vector<1x8x1xf32>
    %141 = vector.shape_cast %140 : vector<1x8x1xf32> to vector<8x1xf32>
    %142 = vector.broadcast %141 : vector<8x1xf32> to vector<8x256xf32>
    %143 = arith.mulf %122, %142 : vector<8x256xf32>
    %c17_i32_60 = arith.constant 17 : i32
    %144 = tpu.dynamic_rotate %122 by %c17_i32_60 dim 1 : vector<8x256xf32>, i32 -> vector<8x256xf32>
    %c1_i32_61 = arith.constant 1 : i32
    %145 = vector.broadcast %c1_i32_61 : i32 to vector<8x256xi32>
    %146 = arith.cmpi sge, %139, %145 : vector<8x256xi32>
    %c16_i32_62 = arith.constant 16 : i32
    %147 = vector.broadcast %c16_i32_62 : i32 to vector<8x256xi32>
    %148 = arith.cmpi sge, %123, %147 : vector<8x256xi32>
    %149 = arith.andi %146, %148 : vector<8x256xi1>
    %cst_63 = arith.constant 0.000000e+00 : f32
    %150 = vector.broadcast %cst_63 : f32 to vector<8x256xf32>
    %151 = arith.select %149, %144, %150 : vector<8x256xi1>, vector<8x256xf32>
    %c0_64 = arith.constant 0 : index
    %c0_65 = arith.constant 0 : index
    %c0_66 = arith.constant 0 : index
    %152 = vector.load %arg5[%c0_64, %c0_65, %c0_66] : memref<9x8x1xf32, #tpu.memory_space<vmem>>, vector<1x8x1xf32>
    %153 = vector.shape_cast %152 : vector<1x8x1xf32> to vector<8x1xf32>
    %154 = vector.broadcast %153 : vector<8x1xf32> to vector<8x256xf32>
    %155 = arith.mulf %151, %154 : vector<8x256xf32>
    %156 = arith.addf %143, %155 : vector<8x256xf32>
    %c16_i32_67 = arith.constant 16 : i32
    %157 = tpu.dynamic_rotate %122 by %c16_i32_67 dim 1 : vector<8x256xf32>, i32 -> vector<8x256xf32>
    %c16_i32_68 = arith.constant 16 : i32
    %158 = vector.broadcast %c16_i32_68 : i32 to vector<8x256xi32>
    %159 = arith.cmpi sge, %123, %158 : vector<8x256xi32>
    %cst_69 = arith.constant 0.000000e+00 : f32
    %160 = vector.broadcast %cst_69 : f32 to vector<8x256xf32>
    %161 = arith.select %159, %157, %160 : vector<8x256xi1>, vector<8x256xf32>
    %c1_70 = arith.constant 1 : index
    %c0_71 = arith.constant 0 : index
    %c0_72 = arith.constant 0 : index
    %162 = vector.load %arg5[%c1_70, %c0_71, %c0_72] : memref<9x8x1xf32, #tpu.memory_space<vmem>>, vector<1x8x1xf32>
    %163 = vector.shape_cast %162 : vector<1x8x1xf32> to vector<8x1xf32>
    %164 = vector.broadcast %163 : vector<8x1xf32> to vector<8x256xf32>
    %165 = arith.mulf %161, %164 : vector<8x256xf32>
    %166 = arith.addf %156, %165 : vector<8x256xf32>
    %c15_i32_73 = arith.constant 15 : i32
    %167 = tpu.dynamic_rotate %122 by %c15_i32_73 dim 1 : vector<8x256xf32>, i32 -> vector<8x256xf32>
    %c15_i32_74 = arith.constant 15 : i32
    %168 = vector.broadcast %c15_i32_74 : i32 to vector<8x256xi32>
    %169 = arith.cmpi slt, %139, %168 : vector<8x256xi32>
    %c16_i32_75 = arith.constant 16 : i32
    %170 = vector.broadcast %c16_i32_75 : i32 to vector<8x256xi32>
    %171 = arith.cmpi sge, %123, %170 : vector<8x256xi32>
    %172 = arith.andi %169, %171 : vector<8x256xi1>
    %cst_76 = arith.constant 0.000000e+00 : f32
    %173 = vector.broadcast %cst_76 : f32 to vector<8x256xf32>
    %174 = arith.select %172, %167, %173 : vector<8x256xi1>, vector<8x256xf32>
    %c2_77 = arith.constant 2 : index
    %c0_78 = arith.constant 0 : index
    %c0_79 = arith.constant 0 : index
    %175 = vector.load %arg5[%c2_77, %c0_78, %c0_79] : memref<9x8x1xf32, #tpu.memory_space<vmem>>, vector<1x8x1xf32>
    %176 = vector.shape_cast %175 : vector<1x8x1xf32> to vector<8x1xf32>
    %177 = vector.broadcast %176 : vector<8x1xf32> to vector<8x256xf32>
    %178 = arith.mulf %174, %177 : vector<8x256xf32>
    %179 = arith.addf %166, %178 : vector<8x256xf32>
    %c1_i32_80 = arith.constant 1 : i32
    %180 = tpu.dynamic_rotate %122 by %c1_i32_80 dim 1 : vector<8x256xf32>, i32 -> vector<8x256xf32>
    %c1_i32_81 = arith.constant 1 : i32
    %181 = vector.broadcast %c1_i32_81 : i32 to vector<8x256xi32>
    %182 = arith.cmpi sge, %139, %181 : vector<8x256xi32>
    %cst_82 = arith.constant 0.000000e+00 : f32
    %183 = vector.broadcast %cst_82 : f32 to vector<8x256xf32>
    %184 = arith.select %182, %180, %183 : vector<8x256xi1>, vector<8x256xf32>
    %c3_83 = arith.constant 3 : index
    %c0_84 = arith.constant 0 : index
    %c0_85 = arith.constant 0 : index
    %185 = vector.load %arg5[%c3_83, %c0_84, %c0_85] : memref<9x8x1xf32, #tpu.memory_space<vmem>>, vector<1x8x1xf32>
    %186 = vector.shape_cast %185 : vector<1x8x1xf32> to vector<8x1xf32>
    %187 = vector.broadcast %186 : vector<8x1xf32> to vector<8x256xf32>
    %188 = arith.mulf %184, %187 : vector<8x256xf32>
    %189 = arith.addf %179, %188 : vector<8x256xf32>
    %c255_i32_86 = arith.constant 255 : i32
    %190 = tpu.dynamic_rotate %122 by %c255_i32_86 dim 1 : vector<8x256xf32>, i32 -> vector<8x256xf32>
    %c15_i32_87 = arith.constant 15 : i32
    %191 = vector.broadcast %c15_i32_87 : i32 to vector<8x256xi32>
    %192 = arith.cmpi slt, %139, %191 : vector<8x256xi32>
    %cst_88 = arith.constant 0.000000e+00 : f32
    %193 = vector.broadcast %cst_88 : f32 to vector<8x256xf32>
    %194 = arith.select %192, %190, %193 : vector<8x256xi1>, vector<8x256xf32>
    %c5_89 = arith.constant 5 : index
    %c0_90 = arith.constant 0 : index
    %c0_91 = arith.constant 0 : index
    %195 = vector.load %arg5[%c5_89, %c0_90, %c0_91] : memref<9x8x1xf32, #tpu.memory_space<vmem>>, vector<1x8x1xf32>
    %196 = vector.shape_cast %195 : vector<1x8x1xf32> to vector<8x1xf32>
    %197 = vector.broadcast %196 : vector<8x1xf32> to vector<8x256xf32>
    %198 = arith.mulf %194, %197 : vector<8x256xf32>
    %199 = arith.addf %189, %198 : vector<8x256xf32>
    %c241_i32_92 = arith.constant 241 : i32
    %200 = tpu.dynamic_rotate %122 by %c241_i32_92 dim 1 : vector<8x256xf32>, i32 -> vector<8x256xf32>
    %c1_i32_93 = arith.constant 1 : i32
    %201 = vector.broadcast %c1_i32_93 : i32 to vector<8x256xi32>
    %202 = arith.cmpi sge, %139, %201 : vector<8x256xi32>
    %c240_i32_94 = arith.constant 240 : i32
    %203 = vector.broadcast %c240_i32_94 : i32 to vector<8x256xi32>
    %204 = arith.cmpi slt, %123, %203 : vector<8x256xi32>
    %205 = arith.andi %202, %204 : vector<8x256xi1>
    %cst_95 = arith.constant 0.000000e+00 : f32
    %206 = vector.broadcast %cst_95 : f32 to vector<8x256xf32>
    %207 = arith.select %205, %200, %206 : vector<8x256xi1>, vector<8x256xf32>
    %c6_96 = arith.constant 6 : index
    %c0_97 = arith.constant 0 : index
    %c0_98 = arith.constant 0 : index
    %208 = vector.load %arg5[%c6_96, %c0_97, %c0_98] : memref<9x8x1xf32, #tpu.memory_space<vmem>>, vector<1x8x1xf32>
    %209 = vector.shape_cast %208 : vector<1x8x1xf32> to vector<8x1xf32>
    %210 = vector.broadcast %209 : vector<8x1xf32> to vector<8x256xf32>
    %211 = arith.mulf %207, %210 : vector<8x256xf32>
    %212 = arith.addf %199, %211 : vector<8x256xf32>
    %c240_i32_99 = arith.constant 240 : i32
    %213 = tpu.dynamic_rotate %122 by %c240_i32_99 dim 1 : vector<8x256xf32>, i32 -> vector<8x256xf32>
    %c240_i32_100 = arith.constant 240 : i32
    %214 = vector.broadcast %c240_i32_100 : i32 to vector<8x256xi32>
    %215 = arith.cmpi slt, %123, %214 : vector<8x256xi32>
    %cst_101 = arith.constant 0.000000e+00 : f32
    %216 = vector.broadcast %cst_101 : f32 to vector<8x256xf32>
    %217 = arith.select %215, %213, %216 : vector<8x256xi1>, vector<8x256xf32>
    %c7_102 = arith.constant 7 : index
    %c0_103 = arith.constant 0 : index
    %c0_104 = arith.constant 0 : index
    %218 = vector.load %arg5[%c7_102, %c0_103, %c0_104] : memref<9x8x1xf32, #tpu.memory_space<vmem>>, vector<1x8x1xf32>
    %219 = vector.shape_cast %218 : vector<1x8x1xf32> to vector<8x1xf32>
    %220 = vector.broadcast %219 : vector<8x1xf32> to vector<8x256xf32>
    %221 = arith.mulf %217, %220 : vector<8x256xf32>
    %222 = arith.addf %212, %221 : vector<8x256xf32>
    %c239_i32_105 = arith.constant 239 : i32
    %223 = tpu.dynamic_rotate %122 by %c239_i32_105 dim 1 : vector<8x256xf32>, i32 -> vector<8x256xf32>
    %c15_i32_106 = arith.constant 15 : i32
    %224 = vector.broadcast %c15_i32_106 : i32 to vector<8x256xi32>
    %225 = arith.cmpi slt, %139, %224 : vector<8x256xi32>
    %c240_i32_107 = arith.constant 240 : i32
    %226 = vector.broadcast %c240_i32_107 : i32 to vector<8x256xi32>
    %227 = arith.cmpi slt, %123, %226 : vector<8x256xi32>
    %228 = arith.andi %225, %227 : vector<8x256xi1>
    %cst_108 = arith.constant 0.000000e+00 : f32
    %229 = vector.broadcast %cst_108 : f32 to vector<8x256xf32>
    %230 = arith.select %228, %223, %229 : vector<8x256xi1>, vector<8x256xf32>
    %c8_109 = arith.constant 8 : index
    %c0_110 = arith.constant 0 : index
    %c0_111 = arith.constant 0 : index
    %231 = vector.load %arg5[%c8_109, %c0_110, %c0_111] : memref<9x8x1xf32, #tpu.memory_space<vmem>>, vector<1x8x1xf32>
    %232 = vector.shape_cast %231 : vector<1x8x1xf32> to vector<8x1xf32>
    %233 = vector.broadcast %232 : vector<8x1xf32> to vector<8x256xf32>
    %234 = arith.mulf %230, %233 : vector<8x256xf32>
    %235 = arith.addf %222, %234 : vector<8x256xf32>
    %c0_112 = arith.constant 0 : index
    %c0_113 = arith.constant 0 : index
    %236 = vector.load %arg6[%c0_112, %c0_113] : memref<8x8xbf16, #tpu.memory_space<vmem>>, vector<8x8xbf16>
    %237 = arith.truncf %235 : vector<8x256xf32> to vector<8x256xbf16>
    %cst_114 = arith.constant dense<0.000000e+00> : vector<8x256xf32>
    %238 = tpu.matmul %236, %237, %cst_114 {dimension_numbers = #tpu.dot_dimension_numbers<[1], [0], [0], [1], [0, 0, 1, 1], [], []>} : vector<8x8xbf16>, vector<8x256xbf16>, vector<8x256xf32> -> vector<8x256xf32>
    %c0_115 = arith.constant 0 : index
    %c0_116 = arith.constant 0 : index
    %239 = vector.load %arg7[%c0_115, %c0_116] : memref<8x1xf32, #tpu.memory_space<vmem>>, vector<8x1xf32>
    %240 = vector.broadcast %239 : vector<8x1xf32> to vector<8x256xf32>
    %241 = arith.addf %238, %240 : vector<8x256xf32>
    %cst_117 = arith.constant 0.000000e+00 : f32
    %242 = vector.broadcast %cst_117 : f32 to vector<8x256xf32>
    %243 = arith.maximumf %241, %242 : vector<8x256xf32>
    %c0_118 = arith.constant 0 : index
    %c0_119 = arith.constant 0 : index
    %c0_120 = arith.constant 0 : index
    %244 = vector.load %arg8[%c0_118, %c0_119, %c0_120] : memref<1x8x256xf32, #tpu.memory_space<vmem>>, vector<1x8x256xf32>
    %245 = vector.shape_cast %244 : vector<1x8x256xf32> to vector<8x256xf32>
    %246 = vector.shape_cast %243 : vector<8x256xf32> to vector<1x8x256xf32>
    tpu.vector_store %arg8[%c0_118, %c0_119, %c0_120], %246 {strides = array<i32>} : memref<1x8x256xf32, #tpu.memory_space<vmem>>, vector<1x8x256xf32>,
    return
  }
  func.func @transform_0(%arg0: i32) -> (i32, i32, i32) {
    %c0_i32 = arith.constant 0 : i32
    %c0_i32_0 = arith.constant 0 : i32
    %c0_i32_1 = arith.constant 0 : i32
    return %arg0, %c0_i32, %c0_i32_0 : i32, i32, i32
  }
  func.func @transform_1(%arg0: i32) -> (i32, i32, i32) {
    %c0_i32 = arith.constant 0 : i32
    %c0_i32_0 = arith.constant 0 : i32
    %c0_i32_1 = arith.constant 0 : i32
    %c0_i32_2 = arith.constant 0 : i32
    return %c0_i32, %c0_i32_0, %c0_i32_1 : i32, i32, i32
  }
  func.func @transform_2(%arg0: i32) -> (i32, i32) {
    %c0_i32 = arith.constant 0 : i32
    %c0_i32_0 = arith.constant 0 : i32
    %c0_i32_1 = arith.constant 0 : i32
    return %c0_i32, %c0_i32_0 : i32, i32
  }
  func.func @transform_3(%arg0: i32) -> (i32, i32) {
    %c0_i32 = arith.constant 0 : i32
    %c0_i32_0 = arith.constant 0 : i32
    %c0_i32_1 = arith.constant 0 : i32
    return %c0_i32, %c0_i32_0 : i32, i32
  }
  func.func @transform_4(%arg0: i32) -> (i32, i32, i32) {
    %c0_i32 = arith.constant 0 : i32
    %c0_i32_0 = arith.constant 0 : i32
    %c0_i32_1 = arith.constant 0 : i32
    %c0_i32_2 = arith.constant 0 : i32
    return %c0_i32, %c0_i32_0, %c0_i32_1 : i32, i32, i32
  }
  func.func @transform_5(%arg0: i32) -> (i32, i32) {
    %c0_i32 = arith.constant 0 : i32
    %c0_i32_0 = arith.constant 0 : i32
    %c0_i32_1 = arith.constant 0 : i32
    return %c0_i32, %c0_i32_0 : i32, i32
  }
  func.func @transform_6(%arg0: i32) -> (i32, i32) {
    %c0_i32 = arith.constant 0 : i32
    %c0_i32_0 = arith.constant 0 : i32
    %c0_i32_1 = arith.constant 0 : i32
    return %c0_i32, %c0_i32_0 : i32, i32
  }
  func.func @transform_7(%arg0: i32) -> (i32, i32, i32) {
    %c0_i32 = arith.constant 0 : i32
    %c0_i32_0 = arith.constant 0 : i32
    %c0_i32_1 = arith.constant 0 : i32
    return %arg0, %c0_i32, %c0_i32_0 : i32, i32, i32
  }
}

</mosaic_0001>

<llo_original>
// kernel: tpu_custom_call.1
$region0: #{tpu_custom_call.1}
  #allocation0 [shape = 'u32[]', space=smem, size = 0x4, offset = 0x4, fixed_abs, tag = 'smem constant byte address 0x4 - core index']
  #allocation1 [shape = 'u32[144,128]{1,0:T(1,128)}', space=vmem, size = 0x12000, scoped, tag = 'internal scratch']
  %s0 = inlined_call_operand.vmem [shape: f32[2,4,256], index: 0, kind: input, shape index: {}]
  %s1 = inlined_call_operand.vmem [shape: f32[9,4,1], index: 1, kind: input, shape index: {}]
  %s2 = inlined_call_operand.vmem [shape: bf16[8,4], index: 2, kind: input, shape index: {}]
  %s3 = inlined_call_operand.vmem [shape: f32[8,1], index: 3, kind: input, shape index: {}]
  %s4 = inlined_call_operand.vmem [shape: f32[9,8,1], index: 4, kind: input, shape index: {}]
  %s5 = inlined_call_operand.vmem [shape: bf16[8,8], index: 5, kind: input, shape index: {}]
  %s6 = inlined_call_operand.vmem [shape: f32[8,1], index: 6, kind: input, shape index: {}]
  %s7 = inlined_call_operand.hbm [shape: f32[2,8,256], index: 7, kind: output, shape index: {}]
  %s8 = sld [smem:[#allocation0]]
  $region61: #{tpu_custom_call.1} parent=0
    _
  %s10 = ssub.s32 1, %s8
  %s11 = scalar_select 0, %s10, %s8
  $region1: #{tpu_custom_call.1} parent=0
    #allocation2 [shape = 'u8[16384]{0}', space=vmem, size = 0x4000, scoped, tag = 'output window, operand 0']
    #allocation3 [shape = 's32[2]{0}', space=sflag, size = 0x8, scoped, tag = 'scoped memory for tpu_custom_call.1']
    %12 = vsyncpa [#allocation3], 0
    %s13 = scalar_lea.sflag [#allocation3], 1
    %14 = vsyncpa %s13, 0
    loop: start=0, step=1, limit=4
    $region2: #{tpu_custom_call.1} parent=1 // loop_pre_header
      _
    $region3: #{tpu_custom_call.1} parent=1 // loop_header
      %s16 = sphi 0, %s20
      %p17 = scmp.ge.s32.totalorder %s16, 4
      %s26 = sphi 0, %s28
      %s29 = sphi 0, %s26
      %s30 = sphi 0, %s29
      %s46 = sphi 0, %s30
      %s50 = sphi 0, %s50
      %s52 = sphi 0, %s50
      %s53 = sphi 0, %s52
      %s67 = sphi 0, %s53
      %s71 = sphi 0, %s71
      %s73 = sphi 0, %s71
      %s74 = sphi 0, %s73
      %s88 = sphi 0, %s74
      %s92 = sphi 0, %s92
      %s94 = sphi 0, %s92
      %s95 = sphi 0, %s94
      %s109 = sphi 0, %s95
      %s113 = sphi 0, %s113
      %s115 = sphi 0, %s113
      %s116 = sphi 0, %s115
      %s130 = sphi 0, %s116
      %s134 = sphi 0, %s134
      %s136 = sphi 0, %s134
      %s137 = sphi 0, %s136
      %s151 = sphi 0, %s137
      %s155 = sphi 0, %s155
      %s157 = sphi 0, %s155
      %s158 = sphi 0, %s157
      %s172 = sphi 0, %s158
      %s178 = sphi 0, %s180
      %s181 = sphi 0, %s178
      %s182 = sphi 0, %s181
      %s198 = sphi 0, %s182
    $region4: #{tpu_custom_call.1} parent=1 // loop_header_branch
      %19 = sbr.rel (%p17) target = $region8
    $region5: #{tpu_custom_call.1} parent=1 // loop_body
      %s21 = ssub.s32 %s16, 1
      %s22 = ssub.s32 %s16, 2
      %s23 = sadd.s32 %s16, 1
      %s24 = ssub.s32 %s16, %s23
      %p25 = scmp.eq.s32.totalorder %s24, 0
      %s27 = sadd.s32 %s26, 1
      %s28 = scalar_select %p25, %s26, %s27
      %p31 = pneg %p25
      %p32 = scmp.eq.s32.totalorder %s16, 1
      %p33 = por %p31, %p32
      %p34 = scmp.ne.s32.totalorder %s26, %s29
      %p35 = scmp.eq.s32.totalorder %s16, 0
      %p36 = por %p34, %p35
      %p37 = scmp.ne.s32.totalorder %s26, %s29
      %p38 = scmp.eq.s32.totalorder %s21, 1
      %p39 = por %p37, %p38
      %p40 = scmp.ne.s32.totalorder %s29, %s30
      %p41 = scmp.eq.s32.totalorder %s21, 0
      %p42 = por %p40, %p41
      %p43 = scmp.ne.s32.totalorder %s29, %s30
      %p44 = scmp.eq.s32.totalorder %s22, 1
      %p45 = por %p43, %p44
      %p47 = scmp.ne.s32.totalorder %s30, %s46
      %p48 = scmp.eq.s32.totalorder %s22, 0
      %p49 = por %p47, %p48
      %s51 = sadd.s32 %s50, 1
      %p54 = scmp.eq.s32.totalorder %s16, 1
      %p55 = scmp.ne.s32.totalorder %s50, %s52
      %p56 = scmp.eq.s32.totalorder %s16, 0
      %p57 = por %p55, %p56
      %p58 = scmp.ne.s32.totalorder %s50, %s52
      %p59 = scmp.eq.s32.totalorder %s21, 1
      %p60 = por %p58, %p59
      %p61 = scmp.ne.s32.totalorder %s52, %s53
      %p62 = scmp.eq.s32.totalorder %s21, 0
      %p63 = por %p61, %p62
      %p64 = scmp.ne.s32.totalorder %s52, %s53
      %p65 = scmp.eq.s32.totalorder %s22, 1
      %p66 = por %p64, %p65
      %p68 = scmp.ne.s32.totalorder %s53, %s67
      %p69 = scmp.eq.s32.totalorder %s22, 0
      %p70 = por %p68, %p69
      %s72 = sadd.s32 %s71, 1
      %p75 = scmp.eq.s32.totalorder %s16, 1
      %p76 = scmp.ne.s32.totalorder %s71, %s73
      %p77 = scmp.eq.s32.totalorder %s16, 0
      %p78 = por %p76, %p77
      %p79 = scmp.ne.s32.totalorder %s71, %s73
      %p80 = scmp.eq.s32.totalorder %s21, 1
      %p81 = por %p79, %p80
      %p82 = scmp.ne.s32.totalorder %s73, %s74
      %p83 = scmp.eq.s32.totalorder %s21, 0
      %p84 = por %p82, %p83
      %p85 = scmp.ne.s32.totalorder %s73, %s74
      %p86 = scmp.eq.s32.totalorder %s22, 1
      %p87 = por %p85, %p86
      %p89 = scmp.ne.s32.totalorder %s74, %s88
      %p90 = scmp.eq.s32.totalorder %s22, 0
      %p91 = por %p89, %p90
      %s93 = sadd.s32 %s92, 1
      %p96 = scmp.eq.s32.totalorder %s16, 1
      %p97 = scmp.ne.s32.totalorder %s92, %s94
      %p98 = scmp.eq.s32.totalorder %s16, 0
      %p99 = por %p97, %p98
      %p100 = scmp.ne.s32.totalorder %s92, %s94
      %p101 = scmp.eq.s32.totalorder %s21, 1
      %p102 = por %p100, %p101
      %p103 = scmp.ne.s32.totalorder %s94, %s95
      %p104 = scmp.eq.s32.totalorder %s21, 0
      %p105 = por %p103, %p104
      %p106 = scmp.ne.s32.totalorder %s94, %s95
      %p107 = scmp.eq.s32.totalorder %s22, 1
      %p108 = por %p106, %p107
      %p110 = scmp.ne.s32.totalorder %s95, %s109
      %p111 = scmp.eq.s32.totalorder %s22, 0
      %p112 = por %p110, %p111
      %s114 = sadd.s32 %s113, 1
      %p117 = scmp.eq.s32.totalorder %s16, 1
      %p118 = scmp.ne.s32.totalorder %s113, %s115
      %p119 = scmp.eq.s32.totalorder %s16, 0
      %p120 = por %p118, %p119
      %p121 = scmp.ne.s32.totalorder %s113, %s115
      %p122 = scmp.eq.s32.totalorder %s21, 1
      %p123 = por %p121, %p122
      %p124 = scmp.ne.s32.totalorder %s115, %s116
      %p125 = scmp.eq.s32.totalorder %s21, 0
      %p126 = por %p124, %p125
      %p127 = scmp.ne.s32.totalorder %s115, %s116
      %p128 = scmp.eq.s32.totalorder %s22, 1
      %p129 = por %p127, %p128
      %p131 = scmp.ne.s32.totalorder %s116, %s130
      %p132 = scmp.eq.s32.totalorder %s22, 0
      %p133 = por %p131, %p132
      %s135 = sadd.s32 %s134, 1
      %p138 = scmp.eq.s32.totalorder %s16, 1
      %p139 = scmp.ne.s32.totalorder %s134, %s136
      %p140 = scmp.eq.s32.totalorder %s16, 0
      %p141 = por %p139, %p140
      %p142 = scmp.ne.s32.totalorder %s134, %s136
      %p143 = scmp.eq.s32.totalorder %s21, 1
      %p144 = por %p142, %p143
      %p145 = scmp.ne.s32.totalorder %s136, %s137
      %p146 = scmp.eq.s32.totalorder %s21, 0
      %p147 = por %p145, %p146
      %p148 = scmp.ne.s32.totalorder %s136, %s137
      %p149 = scmp.eq.s32.totalorder %s22, 1
      %p150 = por %p148, %p149
      %p152 = scmp.ne.s32.totalorder %s137, %s151
      %p153 = scmp.eq.s32.totalorder %s22, 0
      %p154 = por %p152, %p153
      %s156 = sadd.s32 %s155, 1
      %p159 = scmp.eq.s32.totalorder %s16, 1
      %p160 = scmp.ne.s32.totalorder %s155, %s157
      %p161 = scmp.eq.s32.totalorder %s16, 0
      %p162 = por %p160, %p161
      %p163 = scmp.ne.s32.totalorder %s155, %s157
      %p164 = scmp.eq.s32.totalorder %s21, 1
      %p165 = por %p163, %p164
      %p166 = scmp.ne.s32.totalorder %s157, %s158
      %p167 = scmp.eq.s32.totalorder %s21, 0
      %p168 = por %p166, %p167
      %p169 = scmp.ne.s32.totalorder %s157, %s158
      %p170 = scmp.eq.s32.totalorder %s22, 1
      %p171 = por %p169, %p170
      %p173 = scmp.ne.s32.totalorder %s158, %s172
      %p174 = scmp.eq.s32.totalorder %s22, 0
      %p175 = por %p173, %p174
      %s176 = ssub.s32 %s16, %s23
      %p177 = scmp.eq.s32.totalorder %s176, 0
      %s179 = sadd.s32 %s178, 1
      %s180 = scalar_select %p177, %s178, %s179
      %p183 = pneg %p177
      %p184 = scmp.eq.s32.totalorder %s16, 1
      %p185 = por %p183, %p184
      %p186 = scmp.ne.s32.totalorder %s178, %s181
      %p187 = scmp.eq.s32.totalorder %s16, 0
      %p188 = por %p186, %p187
      %p189 = scmp.ne.s32.totalorder %s178, %s181
      %p190 = scmp.eq.s32.totalorder %s21, 1
      %p191 = por %p189, %p190
      %p192 = scmp.ne.s32.totalorder %s181, %s182
      %p193 = scmp.eq.s32.totalorder %s21, 0
      %p194 = por %p192, %p193
      %p195 = scmp.ne.s32.totalorder %s181, %s182
      %p196 = scmp.eq.s32.totalorder %s22, 1
      %p197 = por %p195, %p196
      %p199 = scmp.ne.s32.totalorder %s182, %s198
      %p200 = scmp.eq.s32.totalorder %s22, 0
      %p201 = por %p199, %p200
      %p202 = scmp.le.s32.totalorder 1, %s16
      %p203 = scmp.lt.s32.totalorder %s16, 3
      %p204 = pnand %p202, %p203
      %p205 = pneg %p204
      // Predicated region
      $region9: #{tpu_custom_call.1} parent=5 // pred_check
        _
      $region10: #{tpu_custom_call.1} parent=5 // pred_check_branch
        %207 = sbr.rel (%p204) target = $region12
      $region11: #{tpu_custom_call.1} parent=5 // pred_region
        %s208 = ssub.s32 %s16, 1
        // Predicated region
        $region13: #{tpu_custom_call.1} parent=11 // pred_check
          %p209 = pneg %p63
        $region14: #{tpu_custom_call.1} parent=11 // pred_check_branch
          %211 = sbr.rel (%p209) target = $region16
        $region15: #{tpu_custom_call.1} parent=11 // pred_region
          _
        $region16: #{tpu_custom_call.1} parent=11 // pred_fallthru
          _
        // Predicated region
        $region17: #{tpu_custom_call.1} parent=11 // pred_check
          %p212 = pneg %p84
        $region18: #{tpu_custom_call.1} parent=11 // pred_check_branch
          %214 = sbr.rel (%p212) target = $region20
        $region19: #{tpu_custom_call.1} parent=11 // pred_region
          _
        $region20: #{tpu_custom_call.1} parent=11 // pred_fallthru
          _
        // Predicated region
        $region21: #{tpu_custom_call.1} parent=11 // pred_check
          %p215 = pneg %p105
        $region22: #{tpu_custom_call.1} parent=11 // pred_check_branch
          %217 = sbr.rel (%p215) target = $region24
        $region23: #{tpu_custom_call.1} parent=11 // pred_region
          _
        $region24: #{tpu_custom_call.1} parent=11 // pred_fallthru
          _
        // Predicated region
        $region25: #{tpu_custom_call.1} parent=11 // pred_check
          %p218 = pneg %p126
        $region26: #{tpu_custom_call.1} parent=11 // pred_check_branch
          %220 = sbr.rel (%p218) target = $region28
        $region27: #{tpu_custom_call.1} parent=11 // pred_region
          _
        $region28: #{tpu_custom_call.1} parent=11 // pred_fallthru
          _
        // Predicated region
        $region29: #{tpu_custom_call.1} parent=11 // pred_check
          %p221 = pneg %p147
        $region30: #{tpu_custom_call.1} parent=11 // pred_check_branch
          %223 = sbr.rel (%p221) target = $region32
        $region31: #{tpu_custom_call.1} parent=11 // pred_region
          _
        $region32: #{tpu_custom_call.1} parent=11 // pred_fallthru
          _
        // Predicated region
        $region33: #{tpu_custom_call.1} parent=11 // pred_check
          %p224 = pneg %p168
        $region34: #{tpu_custom_call.1} parent=11 // pred_check_branch
          %226 = sbr.rel (%p224) target = $region36
        $region35: #{tpu_custom_call.1} parent=11 // pred_region
          _
        $region36: #{tpu_custom_call.1} parent=11 // pred_fallthru
          _
      $region12: #{tpu_custom_call.1} parent=5 // pred_fallthru
        _
      %p227 = scmp.lt.s32.totalorder %s16, 2
      // Predicated region
      $region37: #{tpu_custom_call.1} parent=5 // pred_check
        %p228 = pneg %p227
      $region38: #{tpu_custom_call.1} parent=5 // pred_check_branch
        %230 = sbr.rel (%p228) target = $region40
      $region39: #{tpu_custom_call.1} parent=5 // pred_region
        // Predicated region
        $region41: #{tpu_custom_call.1} parent=39 // pred_check
          %p231 = pneg %p36
        $region42: #{tpu_custom_call.1} parent=39 // pred_check_branch
          %233 = sbr.rel (%p231) target = $region44
        $region43: #{tpu_custom_call.1} parent=39 // pred_region
          %p234 = scmp.lt.s32.totalorder %s16, 1
          %s235 = scalar_select %p234, %s16, 1
          %s236 = smul.addr %s235, 2
          %s237 = smul.addr %s236, 4
          %s238 = scalar_lea.vmem %s0, %s237
        $region44: #{tpu_custom_call.1} parent=39 // pred_fallthru
          _
      $region40: #{tpu_custom_call.1} parent=5 // pred_fallthru
        _
      %p239 = scmp.le.s32.totalorder 1, %s16
      %p240 = scmp.lt.s32.totalorder %s16, 3
      %p241 = pnand %p239, %p240
      %p242 = pneg %p241
      // Predicated region
      $region45: #{tpu_custom_call.1} parent=5 // pred_check
        _
      $region46: #{tpu_custom_call.1} parent=5 // pred_check_branch
        %244 = sbr.rel (%p241) target = $region48
      $region47: #{tpu_custom_call.1} parent=5 // pred_region
        %s245 = ssub.s32 %s16, 1
        %p246 = scmp.lt.s32.totalorder %s21, 1
        %s247 = scalar_select %p246, %s21, 1
        %s248 = smul.addr %s247, 2
        %s249 = smul.addr %s248, 4
        %s250 = scalar_lea.vmem %s0, %s249
        %p251 = pneg %p42
        %p252 = pneg %p39
        %p253 = pneg %p63
        %p254 = pneg %p60
        %p255 = pneg %p84
        %p256 = pneg %p81
        %p257 = pneg %p105
        %p258 = pneg %p102
        %p259 = pneg %p126
        %p260 = pneg %p123
        %p261 = pneg %p147
        %p262 = pneg %p144
        %p263 = pneg %p168
        %p264 = pneg %p165
        %p265 = pneg %p194
        %p266 = pneg %p191
        %s267 = sand.u32 %s181, 1
        %s268 = scalar_lea.sflag [#allocation3], %s267
        %s269 = sand.u32 %s181, 1
        %s270 = smul.addr %s269, 16
        %s271 = scalar_lea.vmem [#allocation2], %s270
        %p272 = scmp.lt.s32.totalorder %s21, 1
        %s273 = scalar_select %p272, %s21, 1
        %s274 = smul.addr %s273, 2
        %s275 = smul.addr %s274, 4
        %s276 = scalar_lea.vmem %s0, %s275
        %v278 = vld [vmem:[%s276] sm:$0xff]
        %v279 = vlaneseq
        %v280 = vand.u32 %v279, 127
        %v281 = vadd.s32 %v280, 128
        %vm282 = vcmp.lt.s32.totalorder %v280, 0
        %v283 = vsub.s32 0, %v280
        %v284 = vsel %vm282, %v283, %v280
        %v285 = vshrl.u32 %v284, 4
        %v286 = vand.u32 %v284, 15
        %v287 = vsub.s32 0, %v286
        %v288 = vsel %vm282, %v287, %v286
        %vm289 = vcmp.lt.s32.totalorder %v281, 0
        %v290 = vsub.s32 0, %v281
        %v291 = vsel %vm289, %v290, %v281
        %v292 = vshrl.u32 %v291, 4
        %v293 = vand.u32 %v291, 15
        %v294 = vsub.s32 0, %v293
        %v295 = vsel %vm289, %v294, %v293
        %vm296 = vcmp.ne.s32.totalorder %v288, 0
        %vm297 = vcmp.ne.s32.totalorder %v295, 0
        %vm298 = vcmp.lt.s32.totalorder %v288, 0
        %vm299 = vcmp.lt.s32.totalorder %v295, 0
        %vm300 = vmand %vm298, %vm296
        %vm301 = vmand %vm299, %vm297
        %v302 = vadd.s32 %v288, 16
        %v303 = vadd.s32 %v295, 16
        %v304 = vsel %vm300, %v302, %v288
        %v305 = vsel %vm301, %v303, %v295
        %s306 = scalar_lea.vmem %s1, 16
        %v307 = vld [vmem:[%s306] sm:$0xf]
        %309 = vset.pattern.permute.xlu0 0
        %310 = vperm.xlu0 %309, %v307
        %v311 = vpop.permute.xlu0 %310
        %v313 = vunpack.c.l.s4 839922192
        %v314 = vunpack.c.0.s8 %v313
        %v315 = vlaneseq
        %v316 = vshrl.u32 %v315, 7
        %v317 = vsub.s32 %v314, %v316
        %v318 = vrot.slane %v311, %v317
        %v320 = vmul.f32 %v278, %v318
        %v322 = vcombine.high %v278, %v278
        %324 = vrot.lane.b32.xlu0 %v278, 17
        %v325 = vpop.permute.xlu0 %324
        %326 = vrot.lane.b32.xlu0 %v322, 17
        %v327 = vpop.permute.xlu0 %326
        %vm328 = vcmp.lt.s32.totalorder %v280, 17
        %v329 = vsel %vm328, %v325, %v327
        %v330 = vsel %vm328, %v327, %v325
        %vm331 = vcmp.ge.s32.totalorder %v304, 1
        %vm332 = vcmp.ge.s32.totalorder %v305, 1
        %vm333 = vcmp.ge.s32.totalorder %v280, 16
        %vm334 = vcmp.ge.s32.totalorder %v281, 16
        %vm335 = vmand %vm331, %vm333
        %vm336 = vmand %vm332, %vm334
        %v337 = vsel %vm335, %v330, 0.0
        %v338 = vsel %vm336, %v329, 0.0
        %v339 = vld [vmem:[%s1] sm:$0xf]
        %341 = vset.pattern.permute.xlu0 0
        %342 = vperm.xlu0 %341, %v339
        %v343 = vpop.permute.xlu0 %342
        %v345 = vmul.f32 %v337, %v343
        %v346 = vmul.f32 %v338, %v343
        %v349 = vcombine.low %v345, %v346
        %v351 = vadd.f32 %v320, %v349
        %352 = vrot.lane.b32.xlu0 %v278, 16
        %v353 = vpop.permute.xlu0 %352
        %354 = vrot.lane.b32.xlu0 %v322, 16
        %v355 = vpop.permute.xlu0 %354
        %vm356 = vcmp.lt.s32.totalorder %v280, 16
        %v357 = vsel %vm356, %v353, %v355
        %v358 = vsel %vm356, %v355, %v353
        %v359 = vsel %vm333, %v358, 0.0
        %v360 = vsel %vm334, %v357, 0.0
        %s361 = scalar_lea.vmem %s1, 4
        %v362 = vld [vmem:[%s361] sm:$0xf]
        %364 = vset.pattern.permute.xlu0 0
        %365 = vperm.xlu0 %364, %v362
        %v366 = vpop.permute.xlu0 %365
        %v368 = vmul.f32 %v359, %v366
        %v369 = vmul.f32 %v360, %v366
        %v372 = vcombine.low %v368, %v369
        %v374 = vadd.f32 %v351, %v372
        %375 = vrot.lane.b32.xlu0 %v278, 15
        %v376 = vpop.permute.xlu0 %375
        %377 = vrot.lane.b32.xlu0 %v322, 15
        %v378 = vpop.permute.xlu0 %377
        %vm379 = vcmp.lt.s32.totalorder %v280, 15
        %v380 = vsel %vm379, %v376, %v378
        %v381 = vsel %vm379, %v378, %v376
        %vm382 = vcmp.lt.s32.totalorder %v304, 15
        %vm383 = vcmp.lt.s32.totalorder %v305, 15
        %vm384 = vmand %vm382, %vm333
        %vm385 = vmand %vm383, %vm334
        %v386 = vsel %vm384, %v381, 0.0
        %v387 = vsel %vm385, %v380, 0.0
        %s388 = scalar_lea.vmem %s1, 8
        %v389 = vld [vmem:[%s388] sm:$0xf]
        %391 = vset.pattern.permute.xlu0 0
        %392 = vperm.xlu0 %391, %v389
        %v393 = vpop.permute.xlu0 %392
        %v395 = vmul.f32 %v386, %v393
        %v396 = vmul.f32 %v387, %v393
        %v399 = vcombine.low %v395, %v396
        %v401 = vadd.f32 %v374, %v399
        %402 = vrot.lane.b32.xlu0 %v278, 1
        %v403 = vpop.permute.xlu0 %402
        %404 = vrot.lane.b32.xlu0 %v322, 1
        %v405 = vpop.permute.xlu0 %404
        %vm406 = vcmp.lt.s32.totalorder %v280, 1
        %v407 = vsel %vm406, %v403, %v405
        %v408 = vsel %vm406, %v405, %v403
        %v409 = vsel %vm331, %v408, 0.0
        %v410 = vsel %vm332, %v407, 0.0
        %s411 = scalar_lea.vmem %s1, 12
        %v412 = vld [vmem:[%s411] sm:$0xf]
        %414 = vset.pattern.permute.xlu0 0
        %415 = vperm.xlu0 %414, %v412
        %v416 = vpop.permute.xlu0 %415
        %v418 = vmul.f32 %v409, %v416
        %v419 = vmul.f32 %v410, %v416
        %v422 = vcombine.low %v418, %v419
        %v424 = vadd.f32 %v401, %v422
        %425 = vrot.lane.b32.xlu0 %v278, 127
        %v426 = vpop.permute.xlu0 %425
        %427 = vrot.lane.b32.xlu0 %v322, 127
        %v428 = vpop.permute.xlu0 %427
        %vm429 = vcmp.lt.s32.totalorder %v280, 127
        %v430 = vsel %vm429, %v426, %v428
        %v431 = vsel %vm429, %v428, %v426
        %v432 = vsel %vm382, %v430, 0.0
        %v433 = vsel %vm383, %v431, 0.0
        %s434 = scalar_lea.vmem %s1, 20
        %v435 = vld [vmem:[%s434] sm:$0xf]
        %437 = vset.pattern.permute.xlu0 0
        %438 = vperm.xlu0 %437, %v435
        %v439 = vpop.permute.xlu0 %438
        %v441 = vmul.f32 %v432, %v439
        %v442 = vmul.f32 %v433, %v439
        %v445 = vcombine.low %v441, %v442
        %v447 = vadd.f32 %v424, %v445
        %448 = vrot.lane.b32.xlu0 %v278, 113
        %v449 = vpop.permute.xlu0 %448
        %450 = vrot.lane.b32.xlu0 %v322, 113
        %v451 = vpop.permute.xlu0 %450
        %vm452 = vcmp.lt.s32.totalorder %v280, 113
        %v453 = vsel %vm452, %v449, %v451
        %v454 = vsel %vm452, %v451, %v449
        %vm455 = vcmp.lt.s32.totalorder %v280, 240
        %vm456 = vcmp.lt.s32.totalorder %v281, 240
        %vm457 = vmand %vm331, %vm455
        %vm458 = vmand %vm332, %vm456
        %v459 = vsel %vm457, %v453, 0.0
        %v460 = vsel %vm458, %v454, 0.0
        %s461 = scalar_lea.vmem %s1, 24
        %v462 = vld [vmem:[%s461] sm:$0xf]
        %464 = vset.pattern.permute.xlu0 0
        %465 = vperm.xlu0 %464, %v462
        %v466 = vpop.permute.xlu0 %465
        %v468 = vmul.f32 %v459, %v466
        %v469 = vmul.f32 %v460, %v466
        %v472 = vcombine.low %v468, %v469
        %v474 = vadd.f32 %v447, %v472
        %475 = vrot.lane.b32.xlu0 %v278, 112
        %v476 = vpop.permute.xlu0 %475
        %477 = vrot.lane.b32.xlu0 %v322, 112
        %v478 = vpop.permute.xlu0 %477
        %vm479 = vcmp.lt.s32.totalorder %v280, 112
        %v480 = vsel %vm479, %v476, %v478
        %v481 = vsel %vm479, %v478, %v476
        %v482 = vsel %vm455, %v480, 0.0
        %v483 = vsel %vm456, %v481, 0.0
        %s484 = scalar_lea.vmem %s1, 28
        %v485 = vld [vmem:[%s484] sm:$0xf]
        %487 = vset.pattern.permute.xlu0 0
        %488 = vperm.xlu0 %487, %v485
        %v489 = vpop.permute.xlu0 %488
        %v491 = vmul.f32 %v482, %v489
        %v492 = vmul.f32 %v483, %v489
        %v495 = vcombine.low %v491, %v492
        %v497 = vadd.f32 %v474, %v495
        %498 = vrot.lane.b32.xlu0 %v278, 111
        %v499 = vpop.permute.xlu0 %498
        %500 = vrot.lane.b32.xlu0 %v322, 111
        %v501 = vpop.permute.xlu0 %500
        %vm502 = vcmp.lt.s32.totalorder %v280, 111
        %v503 = vsel %vm502, %v499, %v501
        %v504 = vsel %vm502, %v501, %v499
        %vm505 = vmand %vm382, %vm455
        %vm506 = vmand %vm383, %vm456
        %v507 = vsel %vm505, %v503, 0.0
        %v508 = vsel %vm506, %v504, 0.0
        %s509 = scalar_lea.vmem %s1, 32
        %v510 = vld [vmem:[%s509] sm:$0xf]
        %512 = vset.pattern.permute.xlu0 0
        %513 = vperm.xlu0 %512, %v510
        %v514 = vpop.permute.xlu0 %513
        %v516 = vmul.f32 %v507, %v514
        %v517 = vmul.f32 %v508, %v514
        %v520 = vcombine.low %v516, %v517
        %v522 = vadd.f32 %v497, %v520
        %v523 = vld [vmem:[%s2] sm:$0xf]
        %v525 = vcombine.high %v522, %v522
        %v527 = vpack.c.bf16 %v522, %v522
        %v528 = vpack.c.bf16 %v525, %v525
        %v529 = vld [vmem:[%s3] sm:$0xff]
        %531 = vset.pattern.permute.xlu0 0
        %532 = vperm.xlu0 %531, %v529
        %v533 = vpop.permute.xlu0 %532
        %vm535 = vcmask 31744
        %v537 = vsel %vm535, %v523, 0
        %vm539 = vcmask 1041408
        %v541 = vsel %vm539, %v527, 0
        %v544 = vsel %vm539, %v528, 0
        %546 = vmatprep.subr.bf16.mxu0 0
        %547 = vmatpush1.bf16.msra.mxu0 0
        %548 = vmatprep.subr.bf16.mxu0 0
        %549 = vmatpush1.bf16.msra.mxu0 0
        %550 = vmatprep.subr.bf16.mxu0 0
        %551 = vmatpush1.bf16.msra.mxu0 0
        %552 = vmatprep.subr.bf16.mxu0 0
        %553 = vmatpush1.bf16.msra.mxu0 0
        %554 = vmatprep.subr.bf16.mxu0 0
        %555 = vmatpush1.bf16.msra.mxu0 0
        %556 = vmatprep.subr.bf16.mxu0 0
        %557 = vmatpush1.bf16.msra.mxu0 0
        %558 = vmatprep.subr.bf16.mxu0 0
        %559 = vmatpush1.bf16.msra.mxu0 0
        %560 = vmatprep.subr.bf16.mxu0 %v544
        %561 = vmatpush1.bf16.msra.mxu0 %v541
        %562 = vmatprep.subr.bf16.mxu0 0
        %563 = vmatpush2.bf16.msra.mxu0 0
        %564 = vmatprep.subr.bf16.mxu0 0
        %565 = vmatpush2.bf16.msra.mxu0 0
        %566 = vmatprep.subr.bf16.mxu0 0
        %567 = vmatpush2.bf16.msra.mxu0 0
        %568 = vmatprep.subr.bf16.mxu0 0
        %569 = vmatpush2.bf16.msra.mxu0 0
        %570 = vmatprep.subr.bf16.mxu0 0
        %571 = vmatpush2.bf16.msra.mxu0 0
        %572 = vmatprep.subr.bf16.mxu0 0
        %573 = vmatpush2.bf16.msra.mxu0 0
        %574 = vmatprep.subr.bf16.mxu0 0
        %575 = vmatpush2.bf16.msra.mxu0 0
        %576 = vmatprep.subr.bf16.mxu0 0
        %577 = vmatpush2.bf16.msra.mxu0 0
        %578 = vmatprep.mubr.bf16.mxu0 0
        %579 = vmatmul.mubr.bf16.gmra.mxu0 %v537
        %v580 = vpop.f32.mrf.mxu0
        %v581 = vadd.f32 %v533, %v580
        %v582 = vpop.f32.mrf.mxu0
        %v583 = vadd.f32 %v533, %v582
        %v584 = vpop.f32.mrf.mxu0
        %v585 = vpop.f32.mrf.mxu0
        %586 = vdwg.mxu0
        %v587 = vmax.f32 %v581, 0.0
        %v588 = vmax.f32 %v583, 0.0
        %s589 = scalar_lea.vmem %s4, 32
        %v590 = vld [vmem:[%s589] sm:$0xff]
        %592 = vset.pattern.permute.xlu0 0
        %593 = vperm.xlu0 %592, %v590
        %v594 = vpop.permute.xlu0 %593
        %v596 = vmul.f32 %v587, %v594
        %v597 = vmul.f32 %v588, %v594
        %598 = vrot.lane.b32.xlu0 %v587, 17
        %v599 = vpop.permute.xlu0 %598
        %600 = vrot.lane.b32.xlu0 %v588, 17
        %v601 = vpop.permute.xlu0 %600
        %v602 = vsel %vm328, %v599, %v601
        %v603 = vsel %vm328, %v601, %v599
        %v604 = vsel %vm335, %v603, 0.0
        %v605 = vsel %vm336, %v602, 0.0
        %v606 = vld [vmem:[%s4] sm:$0xff]
        %608 = vset.pattern.permute.xlu0 0
        %609 = vperm.xlu0 %608, %v606
        %v610 = vpop.permute.xlu0 %609
        %v612 = vmul.f32 %v604, %v610
        %v613 = vmul.f32 %v605, %v610
        %v614 = vadd.f32 %v596, %v612
        %v615 = vadd.f32 %v597, %v613
        %616 = vrot.lane.b32.xlu0 %v587, 16
        %v617 = vpop.permute.xlu0 %616
        %618 = vrot.lane.b32.xlu0 %v588, 16
        %v619 = vpop.permute.xlu0 %618
        %v620 = vsel %vm356, %v617, %v619
        %v621 = vsel %vm356, %v619, %v617
        %v622 = vsel %vm333, %v621, 0.0
        %v623 = vsel %vm334, %v620, 0.0
        %s624 = scalar_lea.vmem %s4, 8
        %v625 = vld [vmem:[%s624] sm:$0xff]
        %627 = vset.pattern.permute.xlu0 0
        %628 = vperm.xlu0 %627, %v625
        %v629 = vpop.permute.xlu0 %628
        %v631 = vmul.f32 %v622, %v629
        %v632 = vmul.f32 %v623, %v629
        %v633 = vadd.f32 %v614, %v631
        %v634 = vadd.f32 %v615, %v632
        %635 = vrot.lane.b32.xlu0 %v587, 15
        %v636 = vpop.permute.xlu0 %635
        %637 = vrot.lane.b32.xlu0 %v588, 15
        %v638 = vpop.permute.xlu0 %637
        %v639 = vsel %vm379, %v636, %v638
        %v640 = vsel %vm379, %v638, %v636
        %v641 = vsel %vm384, %v640, 0.0
        %v642 = vsel %vm385, %v639, 0.0
        %s643 = scalar_lea.vmem %s4, 16
        %v644 = vld [vmem:[%s643] sm:$0xff]
        %646 = vset.pattern.permute.xlu0 0
        %647 = vperm.xlu0 %646, %v644
        %v648 = vpop.permute.xlu0 %647
        %v650 = vmul.f32 %v641, %v648
        %v651 = vmul.f32 %v642, %v648
        %v652 = vadd.f32 %v633, %v650
        %v653 = vadd.f32 %v634, %v651
        %654 = vrot.lane.b32.xlu0 %v587, 1
        %v655 = vpop.permute.xlu0 %654
        %656 = vrot.lane.b32.xlu0 %v588, 1
        %v657 = vpop.permute.xlu0 %656
        %v658 = vsel %vm406, %v655, %v657
        %v659 = vsel %vm406, %v657, %v655
        %v660 = vsel %vm331, %v659, 0.0
        %v661 = vsel %vm332, %v658, 0.0
        %s662 = scalar_lea.vmem %s4, 24
        %v663 = vld [vmem:[%s662] sm:$0xff]
        %665 = vset.pattern.permute.xlu0 0
        %666 = vperm.xlu0 %665, %v663
        %v667 = vpop.permute.xlu0 %666
        %v669 = vmul.f32 %v660, %v667
        %v670 = vmul.f32 %v661, %v667
        %v671 = vadd.f32 %v652, %v669
        %v672 = vadd.f32 %v653, %v670
        %673 = vrot.lane.b32.xlu0 %v587, 127
        %v674 = vpop.permute.xlu0 %673
        %675 = vrot.lane.b32.xlu0 %v588, 127
        %v676 = vpop.permute.xlu0 %675
        %v677 = vsel %vm429, %v674, %v676
        %v678 = vsel %vm429, %v676, %v674
        %v679 = vsel %vm382, %v677, 0.0
        %v680 = vsel %vm383, %v678, 0.0
        %s681 = scalar_lea.vmem %s4, 40
        %v682 = vld [vmem:[%s681] sm:$0xff]
        %684 = vset.pattern.permute.xlu0 0
        %685 = vperm.xlu0 %684, %v682
        %v686 = vpop.permute.xlu0 %685
        %v688 = vmul.f32 %v679, %v686
        %v689 = vmul.f32 %v680, %v686
        %v690 = vadd.f32 %v671, %v688
        %v691 = vadd.f32 %v672, %v689
        %692 = vrot.lane.b32.xlu0 %v587, 113
        %v693 = vpop.permute.xlu0 %692
        %694 = vrot.lane.b32.xlu0 %v588, 113
        %v695 = vpop.permute.xlu0 %694
        %v696 = vsel %vm452, %v693, %v695
        %v697 = vsel %vm452, %v695, %v693
        %v698 = vsel %vm457, %v696, 0.0
        %v699 = vsel %vm458, %v697, 0.0
        %s700 = scalar_lea.vmem %s4, 48
        %v701 = vld [vmem:[%s700] sm:$0xff]
        %703 = vset.pattern.permute.xlu0 0
        %704 = vperm.xlu0 %703, %v701
        %v705 = vpop.permute.xlu0 %704
        %v707 = vmul.f32 %v698, %v705
        %v708 = vmul.f32 %v699, %v705
        %v709 = vadd.f32 %v690, %v707
        %v710 = vadd.f32 %v691, %v708
        %711 = vrot.lane.b32.xlu0 %v587, 112
        %v712 = vpop.permute.xlu0 %711
        %713 = vrot.lane.b32.xlu0 %v588, 112
        %v714 = vpop.permute.xlu0 %713
        %v715 = vsel %vm479, %v712, %v714
        %v716 = vsel %vm479, %v714, %v712
        %v717 = vsel %vm455, %v715, 0.0
        %v718 = vsel %vm456, %v716, 0.0
        %s719 = scalar_lea.vmem %s4, 56
        %v720 = vld [vmem:[%s719] sm:$0xff]
        %722 = vset.pattern.permute.xlu0 0
        %723 = vperm.xlu0 %722, %v720
        %v724 = vpop.permute.xlu0 %723
        %v726 = vmul.f32 %v717, %v724
        %v727 = vmul.f32 %v718, %v724
        %v728 = vadd.f32 %v709, %v726
        %v729 = vadd.f32 %v710, %v727
        %730 = vrot.lane.b32.xlu0 %v587, 111
        %v731 = vpop.permute.xlu0 %730
        %732 = vrot.lane.b32.xlu0 %v588, 111
        %v733 = vpop.permute.xlu0 %732
        %v734 = vsel %vm502, %v731, %v733
        %v735 = vsel %vm502, %v733, %v731
        %v736 = vsel %vm505, %v734, 0.0
        %v737 = vsel %vm506, %v735, 0.0
        %s738 = scalar_lea.vmem %s4, 64
        %v739 = vld [vmem:[%s738] sm:$0xff]
        %741 = vset.pattern.permute.xlu0 0
        %742 = vperm.xlu0 %741, %v739
        %v743 = vpop.permute.xlu0 %742
        %v745 = vmul.f32 %v736, %v743
        %v746 = vmul.f32 %v737, %v743
        %v747 = vadd.f32 %v728, %v745
        %v748 = vadd.f32 %v729, %v746
        %v749 = vld [vmem:[%s5] sm:$0xf]
        %v750 = vpack.c.bf16 %v747, %v747
        %v751 = vpack.c.bf16 %v748, %v748
        %v752 = vld [vmem:[%s6] sm:$0xff]
        %754 = vset.pattern.permute.xlu0 0
        %755 = vperm.xlu0 %754, %v752
        %v756 = vpop.permute.xlu0 %755
        %vm758 = vcmask 64512
        %v760 = vsel %vm758, %v749, 0
        %vm762 = vcmask 1043456
        %v764 = vsel %vm762, %v750, 0
        %v767 = vsel %vm762, %v751, 0
        %769 = vmatprep.subr.bf16.mxu0 0
        %770 = vmatpush1.bf16.msra.mxu0 0
        %771 = vmatprep.subr.bf16.mxu0 0
        %772 = vmatpush1.bf16.msra.mxu0 0
        %773 = vmatprep.subr.bf16.mxu0 0
        %774 = vmatpush1.bf16.msra.mxu0 0
        %775 = vmatprep.subr.bf16.mxu0 0
        %776 = vmatpush1.bf16.msra.mxu0 0
        %777 = vmatprep.subr.bf16.mxu0 0
        %778 = vmatpush1.bf16.msra.mxu0 0
        %779 = vmatprep.subr.bf16.mxu0 0
        %780 = vmatpush1.bf16.msra.mxu0 0
        %781 = vmatprep.subr.bf16.mxu0 0
        %782 = vmatpush1.bf16.msra.mxu0 0
        %783 = vmatprep.subr.bf16.mxu0 %v767
        %784 = vmatpush1.bf16.msra.mxu0 %v764
        %785 = vmatprep.subr.bf16.mxu0 0
        %786 = vmatpush2.bf16.msra.mxu0 0
        %787 = vmatprep.subr.bf16.mxu0 0
        %788 = vmatpush2.bf16.msra.mxu0 0
        %789 = vmatprep.subr.bf16.mxu0 0
        %790 = vmatpush2.bf16.msra.mxu0 0
        %791 = vmatprep.subr.bf16.mxu0 0
        %792 = vmatpush2.bf16.msra.mxu0 0
        %793 = vmatprep.subr.bf16.mxu0 0
        %794 = vmatpush2.bf16.msra.mxu0 0
        %795 = vmatprep.subr.bf16.mxu0 0
        %796 = vmatpush2.bf16.msra.mxu0 0
        %797 = vmatprep.subr.bf16.mxu0 0
        %798 = vmatpush2.bf16.msra.mxu0 0
        %799 = vmatprep.subr.bf16.mxu0 0
        %800 = vmatpush2.bf16.msra.mxu0 0
        %801 = vmatprep.mubr.bf16.mxu0 0
        %802 = vmatmul.mubr.bf16.gmra.mxu0 %v760
        %v803 = vpop.f32.mrf.mxu0
        %v804 = vadd.f32 %v756, %v803
        %v805 = vpop.f32.mrf.mxu0
        %v806 = vadd.f32 %v756, %v805
        %v807 = vpop.f32.mrf.mxu0
        %v808 = vpop.f32.mrf.mxu0
        %809 = vdwg.mxu0
        %v810 = vmax.f32 %v804, 0.0
        %v811 = vmax.f32 %v806, 0.0
        %812 = vst [vmem:[%s271] sm:$0xff] %v810
        %813 = vst [vmem:[%s271 + $0x8] sm:$0xff] %v811
        %s814 = sand.u32 %s181, 1
        %s815 = scalar_lea.sflag [#allocation3], %s814
        %s816 = sand.u32 %s181, 1
        %s817 = smul.addr %s816, 16
        %s818 = scalar_lea.vmem [#allocation2], %s817
        // Predicated region
        $region49: #{tpu_custom_call.1} parent=47 // pred_check
          %p819 = pneg %p191
        $region50: #{tpu_custom_call.1} parent=47 // pred_check_branch
          %821 = sbr.rel (%p819) target = $region52
        $region51: #{tpu_custom_call.1} parent=47 // pred_region
          %s823 = ssub.s32 256, 256
          %824 = vsyncadd %s815, %s823
          %s825 = smul.addr %s21, 2
          %s826 = smul.addr %s825, 128
          %s827 = scalar_lea.hbm %s7, %s826
          %s829 = sshll.u32 %s818, 4
          %s830 = int_to_ptr.vmem [resolvable:$true] %s829
          %832 = dma.vmem_to_hbm [thread:$0]  %s830, 256, %s827, %s815
        $region52: #{tpu_custom_call.1} parent=47 // pred_fallthru
          _
      $region48: #{tpu_custom_call.1} parent=5 // pred_fallthru
        _
      %p833 = scmp.le.s32.totalorder 2, %s16
      // Predicated region
      $region53: #{tpu_custom_call.1} parent=5 // pred_check
        %p834 = pneg %p833
      $region54: #{tpu_custom_call.1} parent=5 // pred_check_branch
        %836 = sbr.rel (%p834) target = $region56
      $region55: #{tpu_custom_call.1} parent=5 // pred_region
        %s837 = ssub.s32 %s16, 2
        // Predicated region
        $region57: #{tpu_custom_call.1} parent=55 // pred_check
          %p838 = pneg %p197
        $region58: #{tpu_custom_call.1} parent=55 // pred_check_branch
          %840 = sbr.rel (%p838) target = $region60
        $region59: #{tpu_custom_call.1} parent=55 // pred_region
          %s841 = sand.u32 %s182, 1
          %s842 = scalar_lea.sflag [#allocation3], %s841
          %s843 = sand.u32 %s182, 1
          %s844 = smul.addr %s843, 16
          %s845 = scalar_lea.vmem [#allocation2], %s844
          %846 = dma.done %s842, 256
        $region60: #{tpu_custom_call.1} parent=55 // pred_fallthru
          _
      $region56: #{tpu_custom_call.1} parent=5 // pred_fallthru
        _
    $region6: #{tpu_custom_call.1} parent=1 // loop_footer
      %s20 = sadd.s32 1, %s16
    $region7: #{tpu_custom_call.1} parent=1 // loop_footer_branch
      %15 = sbr.rel target = $region3
    $region8: #{tpu_custom_call.1} parent=1 // loop_exit
      _
    %847 = vsyncpa [#allocation3], 1
    %s848 = scalar_lea.sflag [#allocation3], 1
    %849 = vsyncpa %s848, 1

</llo_original>
